<compile_context>
chip_gen: v7x
topology: tpu7x:2x2x1
jax: 0.10.0
libtpu: 0.0.40
codegen_flags: <defaults>
</compile_context>

<pallas_src>
import functools

import jax
import jax.numpy as jnp
from jax.experimental import pallas as pl
from jax.experimental.pallas import tpu as pltpu

_MIB = 1024 * 1024


# ---------------------------------------------------------------------------
# Hardware probes (best effort; conservative fallbacks)
# ---------------------------------------------------------------------------
def _device_kind():
    try:
        return jax.devices()[0].device_kind.lower()
    except Exception:
        return ""


def _vmem_capacity_bytes():
    """VMEM capacity for this TPU generation; conservative (v7x) fallback."""
    try:
        info = pltpu.get_tpu_info()
        cap = getattr(info, "vmem_capacity_bytes", None)
        if cap:
            return int(cap)
    except Exception:
        pass
    return 64 * _MIB  # v7x per-TensorCore VMEM; safe lower bound everywhere


# ---------------------------------------------------------------------------
# Tiling selection
# ---------------------------------------------------------------------------
def _choose_fused_tiling(B, V, S, Sst, logits_dtype, max_tile_v=None):
    ld = jnp.dtype(logits_dtype)
    kind = _device_kind()
    num_tc = 2 if "v7" in kind else 1   # only v7x exposes 2 TCs to the grid

    # Compare dtype: bf16 is native on v6e/v7x (halves accumulator vregs);
    # v5e has no bf16 VALU so promote to f32 there.  Exact-compare argmax
    # needs no upcast for accuracy.
    if ld == jnp.dtype(jnp.bfloat16) and "v5" not in kind:
        cmp_dtype = jnp.dtype(jnp.bfloat16)
    else:
        cmp_dtype = jnp.dtype(jnp.float32)

    # Batch tiling: split across TensorCores only when there are >1; cap the
    # per-block batch at 64 rows so the (tb,128) value+index accumulators stay
    # well under the 64-vreg budget.
    tb = B
    if num_tc > 1 and tb % (8 * num_tc) == 0:
        tb //= num_tc
    while tb > 64 and tb % 16 == 0:
        tb //= 2

    cap = _vmem_capacity_bytes()
    # Scratch no longer scales with tv -> nearly the whole budget goes to the
    # double-buffered logits tile.
    budget = int(0.45 * cap)
    per_col = max(1, 2 * tb * ld.itemsize)            # 2x: double-buffered
    tv = min(32768, max(128, budget // per_col), pl.cdiv(V, 128) * 128)
    if max_tile_v is not None:
        tv = min(tv, max_tile_v)
    tv = max(128, (tv // 128) * 128)

    need = (2 * tb * tv * ld.itemsize                   # logits double-buffer
            + 2 * tb * 128 * (cmp_dtype.itemsize + 4)   # per-lane accumulators
            + 8 * tb * (2 * S + Sst + 4) * 4            # small-state blocks
            + 4 * _MIB)                                 # margin
    vmem_limit = int(min(cap, max(need, 32 * _MIB)))
    return tb, tv, cmp_dtype, vmem_limit


# ---------------------------------------------------------------------------
# Fused kernel: greedy argmax over vocab tiles + small-state updates
# ---------------------------------------------------------------------------
def _fused_postprocess_kernel(vocab_size, max_seq, valid_last, cmp_dtype,
                              logits_ref, lti_ref, am_ref, gt_ref, gts_ref,
                              gi_ref,
                              tok_out, lti_out, am_out, gt_out, gts_out,
                              gi_out,
                              m_scr, idx_scr):
    k = pl.program_id(1)
    nk = pl.num_programs(1)
    tb, tv = logits_ref.shape
    nc = tv // 128
    neg_inf = jnp.array(-jnp.inf, dtype=cmp_dtype)

    @pl.when(k == 0)
    def _init():
        m_scr[...] = jnp.full(m_scr.shape, -jnp.inf, dtype=m_scr.dtype)
        idx_scr[...] = jnp.zeros(idx_scr.shape, dtype=idx_scr.dtype)

    # ---- per-lane running max / global index, carried in vregs -------------
    m = m_scr[...]
    idx = idx_scr[...]
    lane = jax.lax.broadcasted_iota(jnp.int32, (tb, 128), 1)   # hoisted iota
    base = k * tv
    for c in range(nc):                          # static, fully unrolled
        blk = logits_ref[:, c * 128:(c + 1) * 128]
        if blk.dtype != cmp_dtype:
            blk = blk.astype(cmp_dtype)
        ids = lane + (base + c * 128)            # one scalar add per chunk
        # Only chunks that can hold padded columns (tail of the last vocab
        # tile) pay the tail mask; on earlier tiles 'ids < vocab' is all-true.
        if (c + 1) * 128 > valid_last:
            blk = jnp.where(ids < vocab_size, blk, neg_inf)
        better = blk > m                # strict '>' keeps the first occurrence
        idx = jnp.where(better, ids, idx)
        m = jnp.where(better, blk, m)
    m_scr[...] = m                      # one scratch store per grid step
    idx_scr[...] = idx

    # ---- finalize: one pair of cross-lane reductions + fused state updates -
    @pl.when(k == nk - 1)
    def _finalize():
        row_max = jnp.max(m, axis=-1, keepdims=True)
        tok = jnp.min(jnp.where(m == row_max, idx, jnp.int32(1 << 30)),
                      axis=-1, keepdims=True)                 # (tb, 1) int32
        tok_out[...] = tok

        lti_new = jnp.minimum(lti_ref[...].astype(jnp.int32) + 1, max_seq - 1)
        lti_out[...] = lti_new.astype(lti_out.dtype)

        seq_ids = jax.lax.broadcasted_iota(jnp.int32, am_ref.shape, 1)
        am_out[...] = jnp.where(seq_ids == lti_new,
                                jnp.ones_like(am_ref[...]), am_ref[...])

        gi_old = gi_ref[...].astype(jnp.int32)
        gt_ids = jax.lax.broadcasted_iota(jnp.int32, gt_ref.shape, 1)
        gt_out[...] = jnp.where(gt_ids == gi_old,
                                tok.astype(gt_out.dtype), gt_ref[...])

        gts_ids = jax.lax.broadcasted_iota(jnp.int32, gts_ref.shape, 1)
        gts_out[...] = jnp.where(gts_ids == gi_old,
                                 tok.astype(gts_out.dtype), gts_ref[...])

        gi_out[...] = jnp.minimum(gi_old + 1, max_seq - 1).astype(gi_out.dtype)


def fused_sample_and_update(logits_2d, last_token_index, attention_mask,
                            generated_tokens, generated_tokens_streaming,
                            generated_index, max_tile_v=None):
    B, V = logits_2d.shape
    S = generated_tokens.shape[-1]
    Sst = generated_tokens_streaming.shape[-1]
    tb, tv, cmp_dtype, vmem_limit = _choose_fused_tiling(
        B, V, S, Sst, logits_2d.dtype, max_tile_v=max_tile_v)
    nb, nk = B // tb, pl.cdiv(V, tv)
    valid_last = V - (nk - 1) * tv      # valid columns in the last vocab tile

    kernel = functools.partial(_fused_postprocess_kernel, V, S, valid_last,
                               cmp_dtype)
    small = lambda w: pl.BlockSpec((tb, w), lambda i, k: (i, 0))

    out_shapes = (
        jax.ShapeDtypeStruct((B, 1), jnp.int32),                         # tokens
        jax.ShapeDtypeStruct(last_token_index.shape, last_token_index.dtype),
        jax.ShapeDtypeStruct(attention_mask.shape, attention_mask.dtype),
        jax.ShapeDtypeStruct(generated_tokens.shape, generated_tokens.dtype),
        jax.ShapeDtypeStruct(generated_tokens_streaming.shape,
                             generated_tokens_streaming.dtype),
        jax.ShapeDtypeStruct(generated_index.shape, generated_index.dtype),
    )
    return pl.pallas_call(
        kernel,
        out_shape=out_shapes,
        grid_spec=pltpu.PrefetchScalarGridSpec(
            num_scalar_prefetch=0,
            grid=(nb, nk),
            in_specs=[
                pl.BlockSpec((tb, tv), lambda i, k: (i, k)),   # logits tiles
                small(1),                                      # last_token_index
                small(S),                                      # attention_mask
                small(S),                                      # generated_tokens
                small(Sst),                                    # generated_tokens_streaming
                small(1),                                      # generated_index
            ],
            out_specs=[
                small(1), small(1), small(S), small(S), small(Sst), small(1),
            ],
            scratch_shapes=[pltpu.VMEM((tb, 128), cmp_dtype),
                            pltpu.VMEM((tb, 128), jnp.int32)],
        ),
        # RMW state tensors reuse their input HBM buffers.
        input_output_aliases={1: 1, 2: 2, 3: 3, 4: 4, 5: 5},
        compiler_params=pltpu.CompilerParams(
            dimension_semantics=("parallel", "arbitrary"),
            vmem_limit_bytes=vmem_limit),
    )(logits_2d, last_token_index, attention_mask, generated_tokens,
      generated_tokens_streaming, generated_index)


# ---------------------------------------------------------------------------
# token_count: scalar-prefetch, tile-targeted read-modify-write
# ---------------------------------------------------------------------------
def _token_count_kernel(tv_tc, tok_ref, tc_ref, tc_out):
    b = pl.program_id(0)
    tok = tok_ref[b]
    base = (tok // tv_tc) * tv_tc
    ids = jax.lax.broadcasted_iota(jnp.int32, tc_ref.shape, 2) + base
    tc_out[...] = tc_ref[...] + (ids == tok).astype(tc_out.dtype)


def token_count_targeted_update(tokens, token_count):
    """token_count[b, tokens[b]] += 1, touching only one vocab tile per row."""
    B, V = token_count.shape
    tv_tc = V if V <= 512 else 512
    tc3 = token_count.reshape(B, 1, V)
    tok_flat = tokens.reshape(B).astype(jnp.int32)
    kernel = functools.partial(_token_count_kernel, tv_tc)
    tile_spec = pl.BlockSpec(
        (1, 1, tv_tc), lambda b, tok, tv=tv_tc: (b, 0, tok[b] // tv))
    out = pl.pallas_call(
        kernel,
        out_shape=jax.ShapeDtypeStruct((B, 1, V), token_count.dtype),
        grid_spec=pltpu.PrefetchScalarGridSpec(
            num_scalar_prefetch=1,
            grid=(B,),
            in_specs=[tile_spec],
            out_specs=tile_spec,
        ),
        # Untouched tiles never move: output aliases the input HBM buffer.
        input_output_aliases={1: 0},
        compiler_params=pltpu.CompilerParams(
            dimension_semantics=("arbitrary",)),
    )(tok_flat, tc3)
    return out.reshape(B, V)


# ---------------------------------------------------------------------------
# Top-level greedy postprocess (token_gen_seq_length == 1)
# ---------------------------------------------------------------------------
def postprocess_with_sampling_greedy(logits, last_token_index, attention_mask,
                                     generated_tokens,
                                     generated_tokens_streaming,
                                     generated_index, token_count,
                                     max_tile_v=None):
    B, T, V = logits.shape
    assert T == 1, "only the token_gen_seq_length == 1 path is implemented"
    tokens, lti, am, gt, gts, gi = fused_sample_and_update(
        logits.reshape(B, V), last_token_index, attention_mask,
        generated_tokens, generated_tokens_streaming, generated_index,
        max_tile_v=max_tile_v)
    tc = token_count_targeted_update(tokens, token_count)
    return {
        'tokens': tokens,
        'last_token_index': lti,
        'attention_mask': am,
        'generated_tokens': gt,
        'generated_tokens_streaming': gts,
        'generated_index': gi,
        'token_count': tc,
    }


# ---------------------------------------------------------------------------
# Pure-JAX reference for verification
# ---------------------------------------------------------------------------
def _reference(logits, lti, am, gt, gts, gi, tc):
    B, _, V = logits.shape
    S = gt.shape[-1]
    tokens = jnp.argmax(logits[:, 0, :], axis=-1).astype(jnp.int32)[:, None]
    lti_new = jnp.minimum(lti + 1, S - 1)
    am_new = jnp.where(jnp.arange(S)[None, :] == lti_new, 1, am).astype(am.dtype)
    gt_new = jnp.where(jnp.arange(S)[None, :] == gi, tokens, gt).astype(gt.dtype)
    gts_new = jnp.where(jnp.arange(gts.shape[-1])[None, :] == gi, tokens,
                        gts).astype(gts.dtype)
    gi_new = jnp.minimum(gi + 1, S - 1)
    tc_new = tc + (jnp.arange(V)[None, :] == tokens).astype(tc.dtype)
    return tokens, lti_new, am_new, gt_new, gts_new, gi_new, tc_new


if __name__ == "__main__":
    names = ['tokens', 'last_token_index', 'attention_mask', 'generated_tokens',
             'generated_tokens_streaming', 'generated_index', 'token_count']

    def run_case(seed, B, V, S, Sst, logits_dtype, lti_rows, gi_rows, tc_init,
                 max_tile_v=None):
        key = jax.random.PRNGKey(seed)
        logits = jax.random.normal(key, (B, 1, V),
                                   dtype=jnp.float32).astype(logits_dtype)
        last_token_index = jnp.array(lti_rows, dtype=jnp.int32)
        attention_mask = (jnp.arange(S)[None, :] <= last_token_index
                          ).astype(jnp.int32)
        generated_tokens = jnp.zeros((B, S), dtype=jnp.int32)
        generated_tokens_streaming = jnp.zeros((B, Sst), dtype=jnp.int32)
        generated_index = jnp.array(gi_rows, dtype=jnp.int32)
        token_count = tc_init(B, V)

        ref = _reference(logits, last_token_index, attention_mask,
                         generated_tokens, generated_tokens_streaming,
                         generated_index, token_count)

        out = postprocess_with_sampling_greedy(
            logits, last_token_index, attention_mask, generated_tokens,
            generated_tokens_streaming, generated_index, token_count,
            max_tile_v=max_tile_v)
        out = jax.tree_util.tree_map(jax.block_until_ready, out)

        for name, r in zip(names, ref):
            assert jnp.array_equal(out[name], r), (
                f"mismatch in {name} (B={B}, V={V}, dtype={logits_dtype})")

    # Case 1: f32 logits, multi-tile vocab scan (tile forced to 256, two
    #         128-lane chunks per tile), tests last_token_index clamp and the
    #         data-dependent token_count tile.
    run_case(0, B=2, V=1024, S=16, Sst=8, logits_dtype=jnp.float32,
             lti_rows=[[3], [15]], gi_rows=[[0], [7]],
             tc_init=lambda B, V: jnp.zeros((B, V), dtype=jnp.int32),
             max_tile_v=256)

    # Case 2: bf16 logits, vocab NOT a multiple of the tile (masked tail chunk
    #         only), tests generated_index clamp and nonzero initial
    #         token_count.
    run_case(1, B=2, V=333, S=16, Sst=8, logits_dtype=jnp.bfloat16,
             lti_rows=[[5], [9]], gi_rows=[[15], [2]],
             tc_init=lambda B, V: (jnp.arange(B * V, dtype=jnp.int32)
                                   .reshape(B, V) % 7))

    print("KERNEL_OK")
</pallas_src>

<mosaic_0001>
module attributes {stable_mosaic.version = 11 : i64} {
  func.func @_fused_postprocess_kernel(%arg0: i32, %arg1: i32, %arg2: memref<2x256xf32, #tpu.memory_space<vmem>>, %arg3: memref<2x1xi32, #tpu.memory_space<vmem>>, %arg4: memref<2x16xi32, #tpu.memory_space<vmem>>, %arg5: memref<2x16xi32, #tpu.memory_space<vmem>>, %arg6: memref<2x8xi32, #tpu.memory_space<vmem>>, %arg7: memref<2x1xi32, #tpu.memory_space<vmem>>, %arg8: memref<2x1xi32, #tpu.memory_space<vmem>>, %arg9: memref<2x1xi32, #tpu.memory_space<vmem>>, %arg10: memref<2x16xi32, #tpu.memory_space<vmem>>, %arg11: memref<2x16xi32, #tpu.memory_space<vmem>>, %arg12: memref<2x8xi32, #tpu.memory_space<vmem>>, %arg13: memref<2x1xi32, #tpu.memory_space<vmem>>, %arg14: memref<2x128xf32, #tpu.memory_space<vmem>>, %arg15: memref<2x128xi32, #tpu.memory_space<vmem>>) attributes {dimension_semantics = [#tpu.dimension_semantics<parallel>, #tpu.dimension_semantics<arbitrary>], iteration_bounds = array<i64: 1, 4>, scalar_prefetch = 0 : i64, scratch_operands = 2 : i64, tpu.core_type = #tpu.core_type<tc>, window_params = [{transform_indices = @transform_0, window_bounds = array<i64: 2, 256>}, {transform_indices = @transform_1, window_bounds = array<i64: 2, 1>}, {transform_indices = @transform_2, window_bounds = array<i64: 2, 16>}, {transform_indices = @transform_3, window_bounds = array<i64: 2, 16>}, {transform_indices = @transform_4, window_bounds = array<i64: 2, 8>}, {transform_indices = @transform_5, window_bounds = array<i64: 2, 1>}, {transform_indices = @transform_6, window_bounds = array<i64: 2, 1>}, {transform_indices = @transform_7, window_bounds = array<i64: 2, 1>}, {transform_indices = @transform_8, window_bounds = array<i64: 2, 16>}, {transform_indices = @transform_9, window_bounds = array<i64: 2, 16>}, {transform_indices = @transform_10, window_bounds = array<i64: 2, 8>}, {transform_indices = @transform_11, window_bounds = array<i64: 2, 1>}]} {
    %c0_i32 = arith.constant 0 : i32
    %0 = arith.cmpi eq, %arg1, %c0_i32 : i32
    %1 = arith.extui %0 : i1 to i32
    %c0_i32_0 = arith.constant 0 : i32
    %2 = arith.cmpi ne, %1, %c0_i32_0 : i32
    scf.if %2 {
      %cst = arith.constant 0xFF800000 : f32
      %26 = vector.broadcast %cst : f32 to vector<2x128xf32>
      %c0_13 = arith.constant 0 : index
      %c0_14 = arith.constant 0 : index
      %27 = vector.load %arg14[%c0_13, %c0_14] : memref<2x128xf32, #tpu.memory_space<vmem>>, vector<2x128xf32>
      tpu.vector_store %arg14[%c0_13, %c0_14], %26 {strides = array<i32>} : memref<2x128xf32, #tpu.memory_space<vmem>>, vector<2x128xf32>,
      %c0_i32_15 = arith.constant 0 : i32
      %28 = vector.broadcast %c0_i32_15 : i32 to vector<2x128xi32>
      %c0_16 = arith.constant 0 : index
      %c0_17 = arith.constant 0 : index
      %29 = vector.load %arg15[%c0_16, %c0_17] : memref<2x128xi32, #tpu.memory_space<vmem>>, vector<2x128xi32>
      tpu.vector_store %arg15[%c0_16, %c0_17], %28 {strides = array<i32>} : memref<2x128xi32, #tpu.memory_space<vmem>>, vector<2x128xi32>,
    } else {
    }
    %c0 = arith.constant 0 : index
    %c0_1 = arith.constant 0 : index
    %3 = vector.load %arg14[%c0, %c0_1] : memref<2x128xf32, #tpu.memory_space<vmem>>, vector<2x128xf32>
    %c0_2 = arith.constant 0 : index
    %c0_3 = arith.constant 0 : index
    %4 = vector.load %arg15[%c0_2, %c0_3] : memref<2x128xi32, #tpu.memory_space<vmem>>, vector<2x128xi32>
    %5 = tpu.iota {dimensions = array<i32: 1>} : vector<2x128xi32>
    %c256_i32 = arith.constant 256 : i32
    %6 = arith.muli %arg1, %c256_i32 : i32
    %c0_4 = arith.constant 0 : index
    %c0_5 = arith.constant 0 : index
    %7 = vector.load %arg2[%c0_4, %c0_5] : memref<2x256xf32, #tpu.memory_space<vmem>>, vector<2x128xf32>
    %c0_i32_6 = arith.constant 0 : i32
    %8 = arith.addi %6, %c0_i32_6 : i32
    %9 = vector.broadcast %8 : i32 to vector<2x128xi32>
    %10 = arith.addi %5, %9 : vector<2x128xi32>
    %11 = arith.cmpf ogt, %7, %3 : vector<2x128xf32>
    %12 = arith.select %11, %10, %4 : vector<2x128xi1>, vector<2x128xi32>
    %13 = arith.select %11, %7, %3 : vector<2x128xi1>, vector<2x128xf32>
    %c0_7 = arith.constant 0 : index
    %c128 = arith.constant 128 : index
    %14 = vector.load %arg2[%c0_7, %c128] : memref<2x256xf32, #tpu.memory_space<vmem>>, vector<2x128xf32>
    %c128_i32 = arith.constant 128 : i32
    %15 = arith.addi %6, %c128_i32 : i32
    %16 = vector.broadcast %15 : i32 to vector<2x128xi32>
    %17 = arith.addi %5, %16 : vector<2x128xi32>
    %18 = arith.cmpf ogt, %14, %13 : vector<2x128xf32>
    %19 = arith.select %18, %17, %12 : vector<2x128xi1>, vector<2x128xi32>
    %20 = arith.select %18, %14, %13 : vector<2x128xi1>, vector<2x128xf32>
    %c0_8 = arith.constant 0 : index
    %c0_9 = arith.constant 0 : index
    %21 = vector.load %arg14[%c0_8, %c0_9] : memref<2x128xf32, #tpu.memory_space<vmem>>, vector<2x128xf32>
    tpu.vector_store %arg14[%c0_8, %c0_9], %20 {strides = array<i32>} : memref<2x128xf32, #tpu.memory_space<vmem>>, vector<2x128xf32>,
    %c0_10 = arith.constant 0 : index
    %c0_11 = arith.constant 0 : index
    %22 = vector.load %arg15[%c0_10, %c0_11] : memref<2x128xi32, #tpu.memory_space<vmem>>, vector<2x128xi32>
    tpu.vector_store %arg15[%c0_10, %c0_11], %19 {strides = array<i32>} : memref<2x128xi32, #tpu.memory_space<vmem>>, vector<2x128xi32>,
    %c3_i32 = arith.constant 3 : i32
    %23 = arith.cmpi eq, %arg1, %c3_i32 : i32
    %24 = arith.extui %23 : i1 to i32
    %c0_i32_12 = arith.constant 0 : i32
    %25 = arith.cmpi ne, %24, %c0_i32_12 : i32
    scf.if %25 {
      %cst = arith.constant dense<0xFF800000> : vector<2xf32>
      %26 = vector.multi_reduction <maximumf>, %20, %cst [1] : vector<2x128xf32> to vector<2xf32>
      %27 = vector.shape_cast %26 : vector<2xf32> to vector<2x1xf32>
      %28 = vector.broadcast %27 : vector<2x1xf32> to vector<2x128xf32>
      %29 = arith.cmpf oeq, %20, %28 : vector<2x128xf32>
      %c1073741824_i32 = arith.constant 1073741824 : i32
      %30 = vector.broadcast %c1073741824_i32 : i32 to vector<2x128xi32>
      %31 = arith.select %29, %19, %30 : vector<2x128xi1>, vector<2x128xi32>
      %cst_13 = arith.constant dense<2147483647> : vector<2xi32>
      %32 = vector.multi_reduction <minsi>, %31, %cst_13 [1] : vector<2x128xi32> to vector<2xi32>
      %33 = vector.shape_cast %32 : vector<2xi32> to vector<2x1xi32>
      %c0_14 = arith.constant 0 : index
      %c0_15 = arith.constant 0 : index
      %34 = vector.load %arg8[%c0_14, %c0_15] : memref<2x1xi32, #tpu.memory_space<vmem>>, vector<2x1xi32>
      tpu.vector_store %arg8[%c0_14, %c0_15], %33 {strides = array<i32>} : memref<2x1xi32, #tpu.memory_space<vmem>>, vector<2x1xi32>,
      %c0_16 = arith.constant 0 : index
      %c0_17 = arith.constant 0 : index
      %35 = vector.load %arg3[%c0_16, %c0_17] : memref<2x1xi32, #tpu.memory_space<vmem>>, vector<2x1xi32>
      %c1_i32 = arith.constant 1 : i32
      %36 = vector.broadcast %c1_i32 : i32 to vector<2x1xi32>
      %37 = arith.addi %35, %36 : vector<2x1xi32>
      %c15_i32 = arith.constant 15 : i32
      %38 = vector.broadcast %c15_i32 : i32 to vector<2x1xi32>
      %39 = arith.minsi %37, %38 : vector<2x1xi32>
      %c0_18 = arith.constant 0 : index
      %c0_19 = arith.constant 0 : index
      %40 = vector.load %arg9[%c0_18, %c0_19] : memref<2x1xi32, #tpu.memory_space<vmem>>, vector<2x1xi32>
      tpu.vector_store %arg9[%c0_18, %c0_19], %39 {strides = array<i32>} : memref<2x1xi32, #tpu.memory_space<vmem>>, vector<2x1xi32>,
      %41 = tpu.iota {dimensions = array<i32: 1>} : vector<2x16xi32>
      %42 = vector.broadcast %39 : vector<2x1xi32> to vector<2x16xi32>
      %43 = arith.cmpi eq, %41, %42 : vector<2x16xi32>
      %c1_i32_20 = arith.constant 1 : i32
      %44 = vector.broadcast %c1_i32_20 : i32 to vector<2x16xi32>
      %c0_21 = arith.constant 0 : index
      %c0_22 = arith.constant 0 : index
      %45 = vector.load %arg4[%c0_21, %c0_22] : memref<2x16xi32, #tpu.memory_space<vmem>>, vector<2x16xi32>
      %46 = arith.select %43, %44, %45 : vector<2x16xi1>, vector<2x16xi32>
      %c0_23 = arith.constant 0 : index
      %c0_24 = arith.constant 0 : index
      %47 = vector.load %arg10[%c0_23, %c0_24] : memref<2x16xi32, #tpu.memory_space<vmem>>, vector<2x16xi32>
      tpu.vector_store %arg10[%c0_23, %c0_24], %46 {strides = array<i32>} : memref<2x16xi32, #tpu.memory_space<vmem>>, vector<2x16xi32>,
      %c0_25 = arith.constant 0 : index
      %c0_26 = arith.constant 0 : index
      %48 = vector.load %arg7[%c0_25, %c0_26] : memref<2x1xi32, #tpu.memory_space<vmem>>, vector<2x1xi32>
      %49 = tpu.iota {dimensions = array<i32: 1>} : vector<2x16xi32>
      %50 = vector.broadcast %48 : vector<2x1xi32> to vector<2x16xi32>
      %51 = arith.cmpi eq, %49, %50 : vector<2x16xi32>
      %c0_27 = arith.constant 0 : index
      %c0_28 = arith.constant 0 : index
      %52 = vector.load %arg5[%c0_27, %c0_28] : memref<2x16xi32, #tpu.memory_space<vmem>>, vector<2x16xi32>
      %53 = vector.shape_cast %33 : vector<2x1xi32> to vector<2x1xi32>
      %54 = vector.broadcast %53 : vector<2x1xi32> to vector<2x16xi32>
      %55 = arith.select %51, %54, %52 : vector<2x16xi1>, vector<2x16xi32>
      %c0_29 = arith.constant 0 : index
      %c0_30 = arith.constant 0 : index
      %56 = vector.load %arg11[%c0_29, %c0_30] : memref<2x16xi32, #tpu.memory_space<vmem>>, vector<2x16xi32>
      tpu.vector_store %arg11[%c0_29, %c0_30], %55 {strides = array<i32>} : memref<2x16xi32, #tpu.memory_space<vmem>>, vector<2x16xi32>,
      %57 = tpu.iota {dimensions = array<i32: 1>} : vector<2x8xi32>
      %58 = vector.broadcast %48 : vector<2x1xi32> to vector<2x8xi32>
      %59 = arith.cmpi eq, %57, %58 : vector<2x8xi32>
      %c0_31 = arith.constant 0 : index
      %c0_32 = arith.constant 0 : index
      %60 = vector.load %arg6[%c0_31, %c0_32] : memref<2x8xi32, #tpu.memory_space<vmem>>, vector<2x8xi32>
      %61 = vector.shape_cast %33 : vector<2x1xi32> to vector<2x1xi32>
      %62 = vector.broadcast %61 : vector<2x1xi32> to vector<2x8xi32>
      %63 = arith.select %59, %62, %60 : vector<2x8xi1>, vector<2x8xi32>
      %c0_33 = arith.constant 0 : index
      %c0_34 = arith.constant 0 : index
      %64 = vector.load %arg12[%c0_33, %c0_34] : memref<2x8xi32, #tpu.memory_space<vmem>>, vector<2x8xi32>
      tpu.vector_store %arg12[%c0_33, %c0_34], %63 {strides = array<i32>} : memref<2x8xi32, #tpu.memory_space<vmem>>, vector<2x8xi32>,
      %c1_i32_35 = arith.constant 1 : i32
      %65 = vector.broadcast %c1_i32_35 : i32 to vector<2x1xi32>
      %66 = arith.addi %48, %65 : vector<2x1xi32>
      %c15_i32_36 = arith.constant 15 : i32
      %67 = vector.broadcast %c15_i32_36 : i32 to vector<2x1xi32>
      %68 = arith.minsi %66, %67 : vector<2x1xi32>
      %c0_37 = arith.constant 0 : index
      %c0_38 = arith.constant 0 : index
      %69 = vector.load %arg13[%c0_37, %c0_38] : memref<2x1xi32, #tpu.memory_space<vmem>>, vector<2x1xi32>
      tpu.vector_store %arg13[%c0_37, %c0_38], %68 {strides = array<i32>} : memref<2x1xi32, #tpu.memory_space<vmem>>, vector<2x1xi32>,
    } else {
    }
    return
  }
  func.func @transform_0(%arg0: i32, %arg1: i32) -> (i32, i32) {
    %c0_i32 = arith.constant 0 : i32
    return %arg0, %arg1 : i32, i32
  }
  func.func @transform_1(%arg0: i32, %arg1: i32) -> (i32, i32) {
    %c0_i32 = arith.constant 0 : i32
    %c0_i32_0 = arith.constant 0 : i32
    return %arg0, %c0_i32 : i32, i32
  }
  func.func @transform_2(%arg0: i32, %arg1: i32) -> (i32, i32) {
    %c0_i32 = arith.constant 0 : i32
    %c0_i32_0 = arith.constant 0 : i32
    return %arg0, %c0_i32 : i32, i32
  }
  func.func @transform_3(%arg0: i32, %arg1: i32) -> (i32, i32) {
    %c0_i32 = arith.constant 0 : i32
    %c0_i32_0 = arith.constant 0 : i32
    return %arg0, %c0_i32 : i32, i32
  }
  func.func @transform_4(%arg0: i32, %arg1: i32) -> (i32, i32) {
    %c0_i32 = arith.constant 0 : i32
    %c0_i32_0 = arith.constant 0 : i32
    return %arg0, %c0_i32 : i32, i32
  }
  func.func @transform_5(%arg0: i32, %arg1: i32) -> (i32, i32) {
    %c0_i32 = arith.constant 0 : i32
    %c0_i32_0 = arith.constant 0 : i32
    return %arg0, %c0_i32 : i32, i32
  }
  func.func @transform_6(%arg0: i32, %arg1: i32) -> (i32, i32) {
    %c0_i32 = arith.constant 0 : i32
    %c0_i32_0 = arith.constant 0 : i32
    return %arg0, %c0_i32 : i32, i32
  }
  func.func @transform_7(%arg0: i32, %arg1: i32) -> (i32, i32) {
    %c0_i32 = arith.constant 0 : i32
    %c0_i32_0 = arith.constant 0 : i32
    return %arg0, %c0_i32 : i32, i32
  }
  func.func @transform_8(%arg0: i32, %arg1: i32) -> (i32, i32) {
    %c0_i32 = arith.constant 0 : i32
    %c0_i32_0 = arith.constant 0 : i32
    return %arg0, %c0_i32 : i32, i32
  }
  func.func @transform_9(%arg0: i32, %arg1: i32) -> (i32, i32) {
    %c0_i32 = arith.constant 0 : i32
    %c0_i32_0 = arith.constant 0 : i32
    return %arg0, %c0_i32 : i32, i32
  }
  func.func @transform_10(%arg0: i32, %arg1: i32) -> (i32, i32) {
    %c0_i32 = arith.constant 0 : i32
    %c0_i32_0 = arith.constant 0 : i32
    return %arg0, %c0_i32 : i32, i32
  }
  func.func @transform_11(%arg0: i32, %arg1: i32) -> (i32, i32) {
    %c0_i32 = arith.constant 0 : i32
    %c0_i32_0 = arith.constant 0 : i32
    return %arg0, %c0_i32 : i32, i32
  }
}

</mosaic_0001>

<llo_original>
// kernel: tpu_custom_call.1
$region0: #{tpu_custom_call.1}
  #allocation0 [shape = 'u32[]', space=smem, size = 0x4, offset = 0x4, fixed_abs, tag = 'smem constant byte address 0x4 - core index']
  #allocation1 [shape = 'u32[144,128]{1,0:T(1,128)}', space=vmem, size = 0x12000, scoped, tag = 'internal scratch']
  #allocation2 [shape = 'f32[2,128]{1,0:T(2,128)}', space=vmem, size = 0x400, scoped, tag = 'scratch operand']
  #allocation3 [shape = 's32[2,128]{1,0:T(2,128)}', space=vmem, size = 0x400, scoped, tag = 'scratch operand']
  %s0 = inlined_call_operand.vmem [shape: f32[2,1024], index: 0, kind: input, shape index: {}]
  %s1 = inlined_call_operand.vmem [shape: s32[2,1], index: 1, kind: input, shape index: {}, may-alias: {1,7}]
  %s2 = inlined_call_operand.vmem [shape: s32[2,16], index: 2, kind: input, shape index: {}, may-alias: {2,8}]
  %s3 = inlined_call_operand.vmem [shape: s32[2,16], index: 3, kind: input, shape index: {}, may-alias: {3,9}]
  %s4 = inlined_call_operand.vmem [shape: s32[2,8], index: 4, kind: input, shape index: {}, may-alias: {4,10}]
  %s5 = inlined_call_operand.vmem [shape: s32[2,1], index: 5, kind: input, shape index: {}, may-alias: {5,11}]
  %s6 = inlined_call_operand.vmem [shape: s32[2,1], index: 6, kind: output, shape index: {0}]
  %s7 = inlined_call_operand.vmem [shape: s32[2,1], index: 7, kind: output, shape index: {1}, may-alias: {1,7}]
  %s8 = inlined_call_operand.vmem [shape: s32[2,16], index: 8, kind: output, shape index: {2}, may-alias: {2,8}]
  %s9 = inlined_call_operand.vmem [shape: s32[2,16], index: 9, kind: output, shape index: {3}, may-alias: {3,9}]
  %s10 = inlined_call_operand.vmem [shape: s32[2,8], index: 10, kind: output, shape index: {4}, may-alias: {4,10}]
  %s11 = inlined_call_operand.vmem [shape: s32[2,1], index: 11, kind: output, shape index: {5}, may-alias: {5,11}]
  %12 = xla_tuple %s6, %s7, %s8, %s9, %s10, %s11
  %s13 = sld [smem:[#allocation0]]
  $region105: #{tpu_custom_call.1} parent=0
    _
  %s15 = ssub.s32 1, %s13
  %s16 = scalar_select 0, %s15, %s13
  loop: start=0, step=1, limit=6
  $region2: #{tpu_custom_call.1} parent=0 // loop_pre_header
    _
  $region3: #{tpu_custom_call.1} parent=0 // loop_header
    %s18 = sphi 0, %s22
    %p19 = scmp.ge.s32.totalorder %s18, 6
    %s25 = sphi 0, %s37
    %s26 = sphi 0, %s33
    %s27 = sphi 0, %s25
    %s28 = sphi 0, %s26
    %s29 = sphi 0, %s27
    %s30 = sphi 0, %s28
    %s42 = sphi 0, %s44
    %s45 = sphi 0, %s42
    %s46 = sphi 0, %s45
    %s62 = sphi 0, %s46
    %s68 = sphi 0, %s70
    %s71 = sphi 0, %s68
    %s72 = sphi 0, %s71
    %s88 = sphi 0, %s72
    %s94 = sphi 0, %s96
    %s97 = sphi 0, %s94
    %s98 = sphi 0, %s97
    %s114 = sphi 0, %s98
    %s120 = sphi 0, %s122
    %s123 = sphi 0, %s120
    %s124 = sphi 0, %s123
    %s140 = sphi 0, %s124
    %s146 = sphi 0, %s148
    %s149 = sphi 0, %s146
    %s150 = sphi 0, %s149
    %s166 = sphi 0, %s150
    %s172 = sphi 0, %s174
    %s175 = sphi 0, %s172
    %s176 = sphi 0, %s175
    %s192 = sphi 0, %s176
    %s198 = sphi 0, %s200
    %s201 = sphi 0, %s198
    %s202 = sphi 0, %s201
    %s218 = sphi 0, %s202
    %s224 = sphi 0, %s226
    %s227 = sphi 0, %s224
    %s228 = sphi 0, %s227
    %s244 = sphi 0, %s228
    %s250 = sphi 0, %s252
    %s253 = sphi 0, %s250
    %s254 = sphi 0, %s253
    %s270 = sphi 0, %s254
    %s276 = sphi 0, %s278
    %s279 = sphi 0, %s276
    %s280 = sphi 0, %s279
    %s296 = sphi 0, %s280
    %s302 = sphi 0, %s304
    %s305 = sphi 0, %s302
    %s306 = sphi 0, %s305
    %s322 = sphi 0, %s306
    %s328 = sphi 0, %s330
    %s331 = sphi 0, %s328
    %s332 = sphi 0, %s331
    %s348 = sphi 0, %s332
  $region4: #{tpu_custom_call.1} parent=0 // loop_header_branch
    %21 = sbr.rel (%p19) target = $region8
  $region5: #{tpu_custom_call.1} parent=0 // loop_body
    %s23 = ssub.s32 %s18, 1
    %s24 = ssub.s32 %s18, 2
    %s31 = sadd.s32 1, %s26
    %p32 = scmp.ge.s32.totalorder %s31, 4
    %s33 = scalar_select %p32, 0, %s31
    %s34 = sadd.s32 1, %s25
    %s35 = scalar_select %p32, %s34, %s25
    %p36 = scmp.ge.s32.totalorder %s35, 1
    %s37 = scalar_select %p36, 0, %s35
    %s38 = ssub.s32 %s25, %s37
    %s39 = ssub.s32 %s26, %s33
    %s40 = sor.u32 %s38, %s39
    %p41 = scmp.eq.s32.totalorder %s40, 0
    %s43 = sadd.s32 %s42, 1
    %s44 = scalar_select %p41, %s42, %s43
    %p47 = pneg %p41
    %p48 = scmp.eq.s32.totalorder %s18, 3
    %p49 = por %p47, %p48
    %p50 = scmp.ne.s32.totalorder %s42, %s45
    %p51 = scmp.eq.s32.totalorder %s18, 0
    %p52 = por %p50, %p51
    %p53 = scmp.ne.s32.totalorder %s42, %s45
    %p54 = scmp.eq.s32.totalorder %s23, 3
    %p55 = por %p53, %p54
    %p56 = scmp.ne.s32.totalorder %s45, %s46
    %p57 = scmp.eq.s32.totalorder %s23, 0
    %p58 = por %p56, %p57
    %p59 = scmp.ne.s32.totalorder %s45, %s46
    %p60 = scmp.eq.s32.totalorder %s24, 3
    %p61 = por %p59, %p60
    %p63 = scmp.ne.s32.totalorder %s46, %s62
    %p64 = scmp.eq.s32.totalorder %s24, 0
    %p65 = por %p63, %p64
    %s66 = ssub.s32 %s25, %s37
    %p67 = scmp.eq.s32.totalorder %s66, 0
    %s69 = sadd.s32 %s68, 1
    %s70 = scalar_select %p67, %s68, %s69
    %p73 = pneg %p67
    %p74 = scmp.eq.s32.totalorder %s18, 3
    %p75 = por %p73, %p74
    %p76 = scmp.ne.s32.totalorder %s68, %s71
    %p77 = scmp.eq.s32.totalorder %s18, 0
    %p78 = por %p76, %p77
    %p79 = scmp.ne.s32.totalorder %s68, %s71
    %p80 = scmp.eq.s32.totalorder %s23, 3
    %p81 = por %p79, %p80
    %p82 = scmp.ne.s32.totalorder %s71, %s72
    %p83 = scmp.eq.s32.totalorder %s23, 0
    %p84 = por %p82, %p83
    %p85 = scmp.ne.s32.totalorder %s71, %s72
    %p86 = scmp.eq.s32.totalorder %s24, 3
    %p87 = por %p85, %p86
    %p89 = scmp.ne.s32.totalorder %s72, %s88
    %p90 = scmp.eq.s32.totalorder %s24, 0
    %p91 = por %p89, %p90
    %s92 = ssub.s32 %s25, %s37
    %p93 = scmp.eq.s32.totalorder %s92, 0
    %s95 = sadd.s32 %s94, 1
    %s96 = scalar_select %p93, %s94, %s95
    %p99 = pneg %p93
    %p100 = scmp.eq.s32.totalorder %s18, 3
    %p101 = por %p99, %p100
    %p102 = scmp.ne.s32.totalorder %s94, %s97
    %p103 = scmp.eq.s32.totalorder %s18, 0
    %p104 = por %p102, %p103
    %p105 = scmp.ne.s32.totalorder %s94, %s97
    %p106 = scmp.eq.s32.totalorder %s23, 3
    %p107 = por %p105, %p106
    %p108 = scmp.ne.s32.totalorder %s97, %s98
    %p109 = scmp.eq.s32.totalorder %s23, 0
    %p110 = por %p108, %p109
    %p111 = scmp.ne.s32.totalorder %s97, %s98
    %p112 = scmp.eq.s32.totalorder %s24, 3
    %p113 = por %p111, %p112
    %p115 = scmp.ne.s32.totalorder %s98, %s114
    %p116 = scmp.eq.s32.totalorder %s24, 0
    %p117 = por %p115, %p116
    %s118 = ssub.s32 %s25, %s37
    %p119 = scmp.eq.s32.totalorder %s118, 0
    %s121 = sadd.s32 %s120, 1
    %s122 = scalar_select %p119, %s120, %s121
    %p125 = pneg %p119
    %p126 = scmp.eq.s32.totalorder %s18, 3
    %p127 = por %p125, %p126
    %p128 = scmp.ne.s32.totalorder %s120, %s123
    %p129 = scmp.eq.s32.totalorder %s18, 0
    %p130 = por %p128, %p129
    %p131 = scmp.ne.s32.totalorder %s120, %s123
    %p132 = scmp.eq.s32.totalorder %s23, 3
    %p133 = por %p131, %p132
    %p134 = scmp.ne.s32.totalorder %s123, %s124
    %p135 = scmp.eq.s32.totalorder %s23, 0
    %p136 = por %p134, %p135
    %p137 = scmp.ne.s32.totalorder %s123, %s124
    %p138 = scmp.eq.s32.totalorder %s24, 3
    %p139 = por %p137, %p138
    %p141 = scmp.ne.s32.totalorder %s124, %s140
    %p142 = scmp.eq.s32.totalorder %s24, 0
    %p143 = por %p141, %p142
    %s144 = ssub.s32 %s25, %s37
    %p145 = scmp.eq.s32.totalorder %s144, 0
    %s147 = sadd.s32 %s146, 1
    %s148 = scalar_select %p145, %s146, %s147
    %p151 = pneg %p145
    %p152 = scmp.eq.s32.totalorder %s18, 3
    %p153 = por %p151, %p152
    %p154 = scmp.ne.s32.totalorder %s146, %s149
    %p155 = scmp.eq.s32.totalorder %s18, 0
    %p156 = por %p154, %p155
    %p157 = scmp.ne.s32.totalorder %s146, %s149
    %p158 = scmp.eq.s32.totalorder %s23, 3
    %p159 = por %p157, %p158
    %p160 = scmp.ne.s32.totalorder %s149, %s150
    %p161 = scmp.eq.s32.totalorder %s23, 0
    %p162 = por %p160, %p161
    %p163 = scmp.ne.s32.totalorder %s149, %s150
    %p164 = scmp.eq.s32.totalorder %s24, 3
    %p165 = por %p163, %p164
    %p167 = scmp.ne.s32.totalorder %s150, %s166
    %p168 = scmp.eq.s32.totalorder %s24, 0
    %p169 = por %p167, %p168
    %s170 = ssub.s32 %s25, %s37
    %p171 = scmp.eq.s32.totalorder %s170, 0
    %s173 = sadd.s32 %s172, 1
    %s174 = scalar_select %p171, %s172, %s173
    %p177 = pneg %p171
    %p178 = scmp.eq.s32.totalorder %s18, 3
    %p179 = por %p177, %p178
    %p180 = scmp.ne.s32.totalorder %s172, %s175
    %p181 = scmp.eq.s32.totalorder %s18, 0
    %p182 = por %p180, %p181
    %p183 = scmp.ne.s32.totalorder %s172, %s175
    %p184 = scmp.eq.s32.totalorder %s23, 3
    %p185 = por %p183, %p184
    %p186 = scmp.ne.s32.totalorder %s175, %s176
    %p187 = scmp.eq.s32.totalorder %s23, 0
    %p188 = por %p186, %p187
    %p189 = scmp.ne.s32.totalorder %s175, %s176
    %p190 = scmp.eq.s32.totalorder %s24, 3
    %p191 = por %p189, %p190
    %p193 = scmp.ne.s32.totalorder %s176, %s192
    %p194 = scmp.eq.s32.totalorder %s24, 0
    %p195 = por %p193, %p194
    %s196 = ssub.s32 %s25, %s37
    %p197 = scmp.eq.s32.totalorder %s196, 0
    %s199 = sadd.s32 %s198, 1
    %s200 = scalar_select %p197, %s198, %s199
    %p203 = pneg %p197
    %p204 = scmp.eq.s32.totalorder %s18, 3
    %p205 = por %p203, %p204
    %p206 = scmp.ne.s32.totalorder %s198, %s201
    %p207 = scmp.eq.s32.totalorder %s18, 0
    %p208 = por %p206, %p207
    %p209 = scmp.ne.s32.totalorder %s198, %s201
    %p210 = scmp.eq.s32.totalorder %s23, 3
    %p211 = por %p209, %p210
    %p212 = scmp.ne.s32.totalorder %s201, %s202
    %p213 = scmp.eq.s32.totalorder %s23, 0
    %p214 = por %p212, %p213
    %p215 = scmp.ne.s32.totalorder %s201, %s202
    %p216 = scmp.eq.s32.totalorder %s24, 3
    %p217 = por %p215, %p216
    %p219 = scmp.ne.s32.totalorder %s202, %s218
    %p220 = scmp.eq.s32.totalorder %s24, 0
    %p221 = por %p219, %p220
    %s222 = ssub.s32 %s25, %s37
    %p223 = scmp.eq.s32.totalorder %s222, 0
    %s225 = sadd.s32 %s224, 1
    %s226 = scalar_select %p223, %s224, %s225
    %p229 = pneg %p223
    %p230 = scmp.eq.s32.totalorder %s18, 3
    %p231 = por %p229, %p230
    %p232 = scmp.ne.s32.totalorder %s224, %s227
    %p233 = scmp.eq.s32.totalorder %s18, 0
    %p234 = por %p232, %p233
    %p235 = scmp.ne.s32.totalorder %s224, %s227
    %p236 = scmp.eq.s32.totalorder %s23, 3
    %p237 = por %p235, %p236
    %p238 = scmp.ne.s32.totalorder %s227, %s228
    %p239 = scmp.eq.s32.totalorder %s23, 0
    %p240 = por %p238, %p239
    %p241 = scmp.ne.s32.totalorder %s227, %s228
    %p242 = scmp.eq.s32.totalorder %s24, 3
    %p243 = por %p241, %p242
    %p245 = scmp.ne.s32.totalorder %s228, %s244
    %p246 = scmp.eq.s32.totalorder %s24, 0
    %p247 = por %p245, %p246
    %s248 = ssub.s32 %s25, %s37
    %p249 = scmp.eq.s32.totalorder %s248, 0
    %s251 = sadd.s32 %s250, 1
    %s252 = scalar_select %p249, %s250, %s251
    %p255 = pneg %p249
    %p256 = scmp.eq.s32.totalorder %s18, 3
    %p257 = por %p255, %p256
    %p258 = scmp.ne.s32.totalorder %s250, %s253
    %p259 = scmp.eq.s32.totalorder %s18, 0
    %p260 = por %p258, %p259
    %p261 = scmp.ne.s32.totalorder %s250, %s253
    %p262 = scmp.eq.s32.totalorder %s23, 3
    %p263 = por %p261, %p262
    %p264 = scmp.ne.s32.totalorder %s253, %s254
    %p265 = scmp.eq.s32.totalorder %s23, 0
    %p266 = por %p264, %p265
    %p267 = scmp.ne.s32.totalorder %s253, %s254
    %p268 = scmp.eq.s32.totalorder %s24, 3
    %p269 = por %p267, %p268
    %p271 = scmp.ne.s32.totalorder %s254, %s270
    %p272 = scmp.eq.s32.totalorder %s24, 0
    %p273 = por %p271, %p272
    %s274 = ssub.s32 %s25, %s37
    %p275 = scmp.eq.s32.totalorder %s274, 0
    %s277 = sadd.s32 %s276, 1
    %s278 = scalar_select %p275, %s276, %s277
    %p281 = pneg %p275
    %p282 = scmp.eq.s32.totalorder %s18, 3
    %p283 = por %p281, %p282
    %p284 = scmp.ne.s32.totalorder %s276, %s279
    %p285 = scmp.eq.s32.totalorder %s18, 0
    %p286 = por %p284, %p285
    %p287 = scmp.ne.s32.totalorder %s276, %s279
    %p288 = scmp.eq.s32.totalorder %s23, 3
    %p289 = por %p287, %p288
    %p290 = scmp.ne.s32.totalorder %s279, %s280
    %p291 = scmp.eq.s32.totalorder %s23, 0
    %p292 = por %p290, %p291
    %p293 = scmp.ne.s32.totalorder %s279, %s280
    %p294 = scmp.eq.s32.totalorder %s24, 3
    %p295 = por %p293, %p294
    %p297 = scmp.ne.s32.totalorder %s280, %s296
    %p298 = scmp.eq.s32.totalorder %s24, 0
    %p299 = por %p297, %p298
    %s300 = ssub.s32 %s25, %s37
    %p301 = scmp.eq.s32.totalorder %s300, 0
    %s303 = sadd.s32 %s302, 1
    %s304 = scalar_select %p301, %s302, %s303
    %p307 = pneg %p301
    %p308 = scmp.eq.s32.totalorder %s18, 3
    %p309 = por %p307, %p308
    %p310 = scmp.ne.s32.totalorder %s302, %s305
    %p311 = scmp.eq.s32.totalorder %s18, 0
    %p312 = por %p310, %p311
    %p313 = scmp.ne.s32.totalorder %s302, %s305
    %p314 = scmp.eq.s32.totalorder %s23, 3
    %p315 = por %p313, %p314
    %p316 = scmp.ne.s32.totalorder %s305, %s306
    %p317 = scmp.eq.s32.totalorder %s23, 0
    %p318 = por %p316, %p317
    %p319 = scmp.ne.s32.totalorder %s305, %s306
    %p320 = scmp.eq.s32.totalorder %s24, 3
    %p321 = por %p319, %p320
    %p323 = scmp.ne.s32.totalorder %s306, %s322
    %p324 = scmp.eq.s32.totalorder %s24, 0
    %p325 = por %p323, %p324
    %s326 = ssub.s32 %s25, %s37
    %p327 = scmp.eq.s32.totalorder %s326, 0
    %s329 = sadd.s32 %s328, 1
    %s330 = scalar_select %p327, %s328, %s329
    %p333 = pneg %p327
    %p334 = scmp.eq.s32.totalorder %s18, 3
    %p335 = por %p333, %p334
    %p336 = scmp.ne.s32.totalorder %s328, %s331
    %p337 = scmp.eq.s32.totalorder %s18, 0
    %p338 = por %p336, %p337
    %p339 = scmp.ne.s32.totalorder %s328, %s331
    %p340 = scmp.eq.s32.totalorder %s23, 3
    %p341 = por %p339, %p340
    %p342 = scmp.ne.s32.totalorder %s331, %s332
    %p343 = scmp.eq.s32.totalorder %s23, 0
    %p344 = por %p342, %p343
    %p345 = scmp.ne.s32.totalorder %s331, %s332
    %p346 = scmp.eq.s32.totalorder %s24, 3
    %p347 = por %p345, %p346
    %p349 = scmp.ne.s32.totalorder %s332, %s348
    %p350 = scmp.eq.s32.totalorder %s24, 0
    %p351 = por %p349, %p350
    %p352 = scmp.le.s32.totalorder 1, %s18
    %p353 = scmp.lt.s32.totalorder %s18, 5
    %p354 = pnand %p352, %p353
    %p355 = pneg %p354
    // Predicated region
    $region9: #{tpu_custom_call.1} parent=5 // pred_check
      _
    $region10: #{tpu_custom_call.1} parent=5 // pred_check_branch
      %357 = sbr.rel (%p354) target = $region12
    $region11: #{tpu_custom_call.1} parent=5 // pred_region
      %s358 = ssub.s32 %s18, 1
      // Predicated region
      $region13: #{tpu_custom_call.1} parent=11 // pred_check
        %p359 = pneg %p84
      $region14: #{tpu_custom_call.1} parent=11 // pred_check_branch
        %361 = sbr.rel (%p359) target = $region16
      $region15: #{tpu_custom_call.1} parent=11 // pred_region
        %p362 = scmp.lt.s32.totalorder %s27, 0
        %s363 = scalar_select %p362, %s27, 0
        %s364 = smul.addr %s363, 2
        %s365 = scalar_lea.vmem %s1, %s364
      $region16: #{tpu_custom_call.1} parent=11 // pred_fallthru
        _
      // Predicated region
      $region17: #{tpu_custom_call.1} parent=11 // pred_check
        %p366 = pneg %p110
      $region18: #{tpu_custom_call.1} parent=11 // pred_check_branch
        %368 = sbr.rel (%p366) target = $region20
      $region19: #{tpu_custom_call.1} parent=11 // pred_region
        %p369 = scmp.lt.s32.totalorder %s27, 0
        %s370 = scalar_select %p369, %s27, 0
        %s371 = smul.addr %s370, 2
        %s372 = scalar_lea.vmem %s2, %s371
      $region20: #{tpu_custom_call.1} parent=11 // pred_fallthru
        _
      // Predicated region
      $region21: #{tpu_custom_call.1} parent=11 // pred_check
        %p373 = pneg %p136
      $region22: #{tpu_custom_call.1} parent=11 // pred_check_branch
        %375 = sbr.rel (%p373) target = $region24
      $region23: #{tpu_custom_call.1} parent=11 // pred_region
        %p376 = scmp.lt.s32.totalorder %s27, 0
        %s377 = scalar_select %p376, %s27, 0
        %s378 = smul.addr %s377, 2
        %s379 = scalar_lea.vmem %s3, %s378
      $region24: #{tpu_custom_call.1} parent=11 // pred_fallthru
        _
      // Predicated region
      $region25: #{tpu_custom_call.1} parent=11 // pred_check
        %p380 = pneg %p162
      $region26: #{tpu_custom_call.1} parent=11 // pred_check_branch
        %382 = sbr.rel (%p380) target = $region28
      $region27: #{tpu_custom_call.1} parent=11 // pred_region
        %p383 = scmp.lt.s32.totalorder %s27, 0
        %s384 = scalar_select %p383, %s27, 0
        %s385 = smul.addr %s384, 2
        %s386 = scalar_lea.vmem %s4, %s385
      $region28: #{tpu_custom_call.1} parent=11 // pred_fallthru
        _
      // Predicated region
      $region29: #{tpu_custom_call.1} parent=11 // pred_check
        %p387 = pneg %p188
      $region30: #{tpu_custom_call.1} parent=11 // pred_check_branch
        %389 = sbr.rel (%p387) target = $region32
      $region31: #{tpu_custom_call.1} parent=11 // pred_region
        %p390 = scmp.lt.s32.totalorder %s27, 0
        %s391 = scalar_select %p390, %s27, 0
        %s392 = smul.addr %s391, 2
        %s393 = scalar_lea.vmem %s5, %s392
      $region32: #{tpu_custom_call.1} parent=11 // pred_fallthru
        _
    $region12: #{tpu_custom_call.1} parent=5 // pred_fallthru
      _
    %p394 = scmp.lt.s32.totalorder %s18, 4
    // Predicated region
    $region33: #{tpu_custom_call.1} parent=5 // pred_check
      %p395 = pneg %p394
    $region34: #{tpu_custom_call.1} parent=5 // pred_check_branch
      %397 = sbr.rel (%p395) target = $region36
    $region35: #{tpu_custom_call.1} parent=5 // pred_region
      // Predicated region
      $region37: #{tpu_custom_call.1} parent=35 // pred_check
        %p398 = pneg %p52
      $region38: #{tpu_custom_call.1} parent=35 // pred_check_branch
        %400 = sbr.rel (%p398) target = $region40
      $region39: #{tpu_custom_call.1} parent=35 // pred_region
        %s401 = smul.u32 2, %s26
        %p402 = scmp.lt.s32.totalorder %s25, 0
        %s403 = scalar_select %p402, %s25, 0
        %p404 = scmp.lt.s32.totalorder %s401, 7
        %s405 = scalar_select %p404, %s401, 7
        %s406 = smul.addr %s403, 8
        %s407 = sadd.s32 %s405, %s406
        %s408 = smul.addr %s407, 2
        %s409 = scalar_lea.vmem %s0, %s408
        %s410 = smul.u32 2, %s26
      $region40: #{tpu_custom_call.1} parent=35 // pred_fallthru
        _
    $region36: #{tpu_custom_call.1} parent=5 // pred_fallthru
      _
    %p411 = scmp.le.s32.totalorder 1, %s18
    %p412 = scmp.lt.s32.totalorder %s18, 5
    %p413 = pnand %p411, %p412
    %p414 = pneg %p413
    // Predicated region
    $region41: #{tpu_custom_call.1} parent=5 // pred_check
      _
    $region42: #{tpu_custom_call.1} parent=5 // pred_check_branch
      %416 = sbr.rel (%p413) target = $region44
    $region43: #{tpu_custom_call.1} parent=5 // pred_region
      %s417 = ssub.s32 %s18, 1
      %s418 = smul.u32 2, %s28
      %p419 = scmp.lt.s32.totalorder %s27, 0
      %s420 = scalar_select %p419, %s27, 0
      %p421 = scmp.lt.s32.totalorder %s418, 7
      %s422 = scalar_select %p421, %s418, 7
      %s423 = smul.addr %s420, 8
      %s424 = sadd.s32 %s422, %s423
      %s425 = smul.addr %s424, 2
      %s426 = scalar_lea.vmem %s0, %s425
      %p427 = pneg %p58
      %p428 = pneg %p55
      %p429 = scmp.lt.s32.totalorder %s27, 0
      %s430 = scalar_select %p429, %s27, 0
      %s431 = smul.addr %s430, 2
      %s432 = scalar_lea.vmem %s1, %s431
      %p433 = pneg %p84
      %p434 = pneg %p81
      %p435 = scmp.lt.s32.totalorder %s27, 0
      %s436 = scalar_select %p435, %s27, 0
      %s437 = smul.addr %s436, 2
      %s438 = scalar_lea.vmem %s2, %s437
      %p439 = pneg %p110
      %p440 = pneg %p107
      %p441 = scmp.lt.s32.totalorder %s27, 0
      %s442 = scalar_select %p441, %s27, 0
      %s443 = smul.addr %s442, 2
      %s444 = scalar_lea.vmem %s3, %s443
      %p445 = pneg %p136
      %p446 = pneg %p133
      %p447 = scmp.lt.s32.totalorder %s27, 0
      %s448 = scalar_select %p447, %s27, 0
      %s449 = smul.addr %s448, 2
      %s450 = scalar_lea.vmem %s4, %s449
      %p451 = pneg %p162
      %p452 = pneg %p159
      %p453 = scmp.lt.s32.totalorder %s27, 0
      %s454 = scalar_select %p453, %s27, 0
      %s455 = smul.addr %s454, 2
      %s456 = scalar_lea.vmem %s5, %s455
      %p457 = pneg %p188
      %p458 = pneg %p185
      %p459 = pneg %p214
      %p460 = pneg %p211
      %p461 = scmp.lt.s32.totalorder %s27, 0
      %s462 = scalar_select %p461, %s27, 0
      %s463 = smul.addr %s462, 2
      %s464 = scalar_lea.vmem %s6, %s463
      %p465 = pneg %p240
      %p466 = pneg %p237
      %p467 = scmp.lt.s32.totalorder %s27, 0
      %s468 = scalar_select %p467, %s27, 0
      %s469 = smul.addr %s468, 2
      %s470 = scalar_lea.vmem %s7, %s469
      %p471 = pneg %p266
      %p472 = pneg %p263
      %p473 = scmp.lt.s32.totalorder %s27, 0
      %s474 = scalar_select %p473, %s27, 0
      %s475 = smul.addr %s474, 2
      %s476 = scalar_lea.vmem %s8, %s475
      %p477 = pneg %p292
      %p478 = pneg %p289
      %p479 = scmp.lt.s32.totalorder %s27, 0
      %s480 = scalar_select %p479, %s27, 0
      %s481 = smul.addr %s480, 2
      %s482 = scalar_lea.vmem %s9, %s481
      %p483 = pneg %p318
      %p484 = pneg %p315
      %p485 = scmp.lt.s32.totalorder %s27, 0
      %s486 = scalar_select %p485, %s27, 0
      %s487 = smul.addr %s486, 2
      %s488 = scalar_lea.vmem %s10, %s487
      %p489 = pneg %p344
      %p490 = pneg %p341
      %p491 = scmp.lt.s32.totalorder %s27, 0
      %s492 = scalar_select %p491, %s27, 0
      %s493 = smul.addr %s492, 2
      %s494 = scalar_lea.vmem %s11, %s493
      %s495 = smul.u32 2, %s28
      %p496 = scmp.lt.s32.totalorder %s27, 0
      %s497 = scalar_select %p496, %s27, 0
      %p498 = scmp.lt.s32.totalorder %s495, 7
      %s499 = scalar_select %p498, %s495, 7
      %s500 = smul.addr %s497, 8
      %s501 = sadd.s32 %s499, %s500
      %s502 = smul.addr %s501, 2
      %s503 = scalar_lea.vmem %s0, %s502
      %s504 = smul.u32 2, %s28
      %p505 = scmp.lt.s32.totalorder %s27, 0
      %s506 = scalar_select %p505, %s27, 0
      %s507 = smul.addr %s506, 2
      %s508 = scalar_lea.vmem %s1, %s507
      %p509 = scmp.lt.s32.totalorder %s27, 0
      %s510 = scalar_select %p509, %s27, 0
      %s511 = smul.addr %s510, 2
      %s512 = scalar_lea.vmem %s2, %s511
      %p513 = scmp.lt.s32.totalorder %s27, 0
      %s514 = scalar_select %p513, %s27, 0
      %s515 = smul.addr %s514, 2
      %s516 = scalar_lea.vmem %s3, %s515
      %p517 = scmp.lt.s32.totalorder %s27, 0
      %s518 = scalar_select %p517, %s27, 0
      %s519 = smul.addr %s518, 2
      %s520 = scalar_lea.vmem %s4, %s519
      %p521 = scmp.lt.s32.totalorder %s27, 0
      %s522 = scalar_select %p521, %s27, 0
      %s523 = smul.addr %s522, 2
      %s524 = scalar_lea.vmem %s5, %s523
      %p525 = scmp.lt.s32.totalorder %s27, 0
      %s526 = scalar_select %p525, %s27, 0
      %s527 = smul.addr %s526, 2
      %s528 = scalar_lea.vmem %s6, %s527
      %p529 = scmp.lt.s32.totalorder %s27, 0
      %s530 = scalar_select %p529, %s27, 0
      %s531 = smul.addr %s530, 2
      %s532 = scalar_lea.vmem %s7, %s531
      %p533 = scmp.lt.s32.totalorder %s27, 0
      %s534 = scalar_select %p533, %s27, 0
      %s535 = smul.addr %s534, 2
      %s536 = scalar_lea.vmem %s8, %s535
      %p537 = scmp.lt.s32.totalorder %s27, 0
      %s538 = scalar_select %p537, %s27, 0
      %s539 = smul.addr %s538, 2
      %s540 = scalar_lea.vmem %s9, %s539
      %p541 = scmp.lt.s32.totalorder %s27, 0
      %s542 = scalar_select %p541, %s27, 0
      %s543 = smul.addr %s542, 2
      %s544 = scalar_lea.vmem %s10, %s543
      %p545 = scmp.lt.s32.totalorder %s27, 0
      %s546 = scalar_select %p545, %s27, 0
      %s547 = smul.addr %s546, 2
      %s548 = scalar_lea.vmem %s11, %s547
      %p549 = scmp.eq.s32.totalorder %s28, 0
      // Predicated region
      $region45: #{tpu_custom_call.1} parent=43 // pred_check
        %p550 = pneg %p549
      $region46: #{tpu_custom_call.1} parent=43 // pred_check_branch
        %552 = sbr.rel (%p550) target = $region48
      $region47: #{tpu_custom_call.1} parent=43 // pred_region
        %553 = vst [vmem:[#allocation2] sm:$0x3] -inf
        %554 = vst [vmem:[#allocation3] sm:$0x3] 0
      $region48: #{tpu_custom_call.1} parent=43 // pred_fallthru
        _
      %v555 = vld [vmem:[#allocation2] sm:$0x3]
      %v556 = vld [vmem:[#allocation3] sm:$0x3]
      %v557 = vlaneseq
      %v558 = vand.u32 %v557, 127
      %s559 = smul.u32 %s28, 256
      %v560 = vld [vmem:[%s503] sm:$0x3]
      %v561 = vstv %s559
      %v562 = vadd.s32 %v558, %v561
      %vm563 = vcmp.gt.f32.partialorder %v560, %v555
      %v564 = vsel %vm563, %v562, %v556
      %v565 = vsel %vm563, %v560, %v555
      %v566 = vld [vmem:[%s503 + $0x2] sm:$0x3]
      %s567 = sadd.s32 %s559, 128
      %v568 = vstv %s567
      %v569 = vadd.s32 %v558, %v568
      %vm570 = vcmp.gt.f32.partialorder %v566, %v565
      %v571 = vsel %vm570, %v569, %v564
      %v572 = vsel %vm570, %v566, %v565
      %573 = vst [vmem:[#allocation2] sm:$0x3] %v572
      %574 = vst [vmem:[#allocation3] sm:$0x3] %v571
      %p575 = scmp.eq.s32.totalorder %s28, 3
      // Predicated region
      $region49: #{tpu_custom_call.1} parent=43 // pred_check
        %p576 = pneg %p575
      $region50: #{tpu_custom_call.1} parent=43 // pred_check_branch
        %578 = sbr.rel (%p576) target = $region52
      $region51: #{tpu_custom_call.1} parent=43 // pred_region
        %vm579 = vcmask 1041408
        %v580 = vsel %vm579, %v572, -inf
        %581 = vmax.xlane.f32.xlu0 %v580
        %v582 = vpop.xlane.xlu0 %581
        %vm583 = vcmp.eq.f32.partialorder %v572, %v582
        %v584 = vsel %vm583, %v571, 1073741824
        %v585 = vsel %vm579, %v584, 2147483647
        %v586 = vand.u32 %v585, 65535
        %v587 = vshra.s32 %v585, 16
        %v588 = vcvt.s32.f32 %v586
        %v589 = vcvt.s32.f32 %v587
        %590 = vmin.xlane.f32.xlu0 %v589
        %v591 = vpop.xlane.xlu0 %590
        %vm592 = vcmp.eq.f32.partialorder %v589, %v591
        %v593 = vsel %vm592, %v588, inf
        %594 = vmin.xlane.f32.xlu0 %v593
        %v595 = vpop.xlane.xlu0 %594
        %v596 = vcvt.f32.s32 %v595
        %v597 = vcvt.f32.s32 %v591
        %v598 = vshll.u32 %v597, 16
        %v599 = vadd.s32 %v598, %v596
        %vm600 = vcmask 1024
        %601 = vst.msk [vmem:[%s528] sm:$0x3] %vm600, %v599
        %v602 = vld [vmem:[%s508] sm:$0x3]
        %v603 = vadd.s32 %v602, 1
        %vm604 = vcmp.lt.s32.totalorder %v603, 15
        %v605 = vsel %vm604, %v603, 15
        %606 = vst.msk [vmem:[%s532] sm:$0x3] %vm600, %v605
        %607 = vset.pattern.permute.xlu0 0
        %608 = vperm.xlu0 %607, %v605
        %v609 = vpop.permute.xlu0 %608
        %vm610 = vcmp.eq.s32.totalorder %v558, %v609
        %v611 = vld [vmem:[%s512] sm:$0x3]
        %v612 = vsel %vm610, 1, %v611
        %vm613 = vcmask 123904
        %614 = vst.msk [vmem:[%s536] sm:$0x3] %vm613, %v612
        %v615 = vld [vmem:[%s524] sm:$0x3]
        %616 = vset.pattern.permute.xlu0 0
        %617 = vperm.xlu0 %616, %v615
        %v618 = vpop.permute.xlu0 %617
        %vm619 = vcmp.eq.s32.totalorder %v558, %v618
        %v620 = vld [vmem:[%s516] sm:$0x3]
        %v621 = vsel %vm619, %v599, %v620
        %622 = vst.msk [vmem:[%s540] sm:$0x3] %vm613, %v621
        %v623 = vld [vmem:[%s520] sm:$0x3]
        %v624 = vsel %vm619, %v599, %v623
        %vm625 = vcmask 58368
        %626 = vst.msk [vmem:[%s544] sm:$0x3] %vm625, %v624
        %v627 = vadd.s32 %v615, 1
        %vm628 = vcmp.lt.s32.totalorder %v627, 15
        %v629 = vsel %vm628, %v627, 15
        %630 = vst.msk [vmem:[%s548] sm:$0x3] %vm600, %v629
      $region52: #{tpu_custom_call.1} parent=43 // pred_fallthru
        _
      %p631 = scmp.lt.s32.totalorder %s27, 0
      %s632 = scalar_select %p631, %s27, 0
      %s633 = smul.addr %s632, 2
      %s634 = scalar_lea.vmem %s6, %s633
      %p635 = scmp.lt.s32.totalorder %s27, 0
      %s636 = scalar_select %p635, %s27, 0
      %s637 = smul.addr %s636, 2
      %s638 = scalar_lea.vmem %s7, %s637
      %p639 = scmp.lt.s32.totalorder %s27, 0
      %s640 = scalar_select %p639, %s27, 0
      %s641 = smul.addr %s640, 2
      %s642 = scalar_lea.vmem %s8, %s641
      %p643 = scmp.lt.s32.totalorder %s27, 0
      %s644 = scalar_select %p643, %s27, 0
      %s645 = smul.addr %s644, 2
      %s646 = scalar_lea.vmem %s9, %s645
      %p647 = scmp.lt.s32.totalorder %s27, 0
      %s648 = scalar_select %p647, %s27, 0
      %s649 = smul.addr %s648, 2
      %s650 = scalar_lea.vmem %s10, %s649
      %p651 = scmp.lt.s32.totalorder %s27, 0
      %s652 = scalar_select %p651, %s27, 0
      %s653 = smul.addr %s652, 2
      %s654 = scalar_lea.vmem %s11, %s653
      // Predicated region
      $region53: #{tpu_custom_call.1} parent=43 // pred_check
        %p655 = pneg %p211
      $region54: #{tpu_custom_call.1} parent=43 // pred_check_branch
        %657 = sbr.rel (%p655) target = $region56
      $region55: #{tpu_custom_call.1} parent=43 // pred_region
        _
      $region56: #{tpu_custom_call.1} parent=43 // pred_fallthru
        _
      // Predicated region
      $region57: #{tpu_custom_call.1} parent=43 // pred_check
        %p658 = pneg %p237
      $region58: #{tpu_custom_call.1} parent=43 // pred_check_branch
        %660 = sbr.rel (%p658) target = $region60
      $region59: #{tpu_custom_call.1} parent=43 // pred_region
        _
      $region60: #{tpu_custom_call.1} parent=43 // pred_fallthru
        _
      // Predicated region
      $region61: #{tpu_custom_call.1} parent=43 // pred_check
        %p661 = pneg %p263
      $region62: #{tpu_custom_call.1} parent=43 // pred_check_branch
        %663 = sbr.rel (%p661) target = $region64
      $region63: #{tpu_custom_call.1} parent=43 // pred_region
        _
      $region64: #{tpu_custom_call.1} parent=43 // pred_fallthru
        _
      // Predicated region
      $region65: #{tpu_custom_call.1} parent=43 // pred_check
        %p664 = pneg %p289
      $region66: #{tpu_custom_call.1} parent=43 // pred_check_branch
        %666 = sbr.rel (%p664) target = $region68
      $region67: #{tpu_custom_call.1} parent=43 // pred_region
        _
      $region68: #{tpu_custom_call.1} parent=43 // pred_fallthru
        _
      // Predicated region
      $region69: #{tpu_custom_call.1} parent=43 // pred_check
        %p667 = pneg %p315
      $region70: #{tpu_custom_call.1} parent=43 // pred_check_branch
        %669 = sbr.rel (%p667) target = $region72
      $region71: #{tpu_custom_call.1} parent=43 // pred_region
        _
      $region72: #{tpu_custom_call.1} parent=43 // pred_fallthru
        _
      // Predicated region
      $region73: #{tpu_custom_call.1} parent=43 // pred_check
        %p670 = pneg %p341
      $region74: #{tpu_custom_call.1} parent=43 // pred_check_branch
        %672 = sbr.rel (%p670) target = $region76
      $region75: #{tpu_custom_call.1} parent=43 // pred_region
        _
      $region76: #{tpu_custom_call.1} parent=43 // pred_fallthru
        _
      // Predicated region
      $region77: #{tpu_custom_call.1} parent=43 // pred_check
        %p673 = pneg %p211
      $region78: #{tpu_custom_call.1} parent=43 // pred_check_branch
        %675 = sbr.rel (%p673) target = $region80
      $region79: #{tpu_custom_call.1} parent=43 // pred_region
        %p676 = scmp.lt.s32.totalorder %s27, 0
        %s677 = scalar_select %p676, %s27, 0
        %s678 = smul.addr %s677, 2
        %s679 = scalar_lea.vmem %s6, %s678
      $region80: #{tpu_custom_call.1} parent=43 // pred_fallthru
        _
      // Predicated region
      $region81: #{tpu_custom_call.1} parent=43 // pred_check
        %p680 = pneg %p237
      $region82: #{tpu_custom_call.1} parent=43 // pred_check_branch
        %682 = sbr.rel (%p680) target = $region84
      $region83: #{tpu_custom_call.1} parent=43 // pred_region
        %p683 = scmp.lt.s32.totalorder %s27, 0
        %s684 = scalar_select %p683, %s27, 0
        %s685 = smul.addr %s684, 2
        %s686 = scalar_lea.vmem %s7, %s685
      $region84: #{tpu_custom_call.1} parent=43 // pred_fallthru
        _
      // Predicated region
      $region85: #{tpu_custom_call.1} parent=43 // pred_check
        %p687 = pneg %p263
      $region86: #{tpu_custom_call.1} parent=43 // pred_check_branch
        %689 = sbr.rel (%p687) target = $region88
      $region87: #{tpu_custom_call.1} parent=43 // pred_region
        %p690 = scmp.lt.s32.totalorder %s27, 0
        %s691 = scalar_select %p690, %s27, 0
        %s692 = smul.addr %s691, 2
        %s693 = scalar_lea.vmem %s8, %s692
      $region88: #{tpu_custom_call.1} parent=43 // pred_fallthru
        _
      // Predicated region
      $region89: #{tpu_custom_call.1} parent=43 // pred_check
        %p694 = pneg %p289
      $region90: #{tpu_custom_call.1} parent=43 // pred_check_branch
        %696 = sbr.rel (%p694) target = $region92
      $region91: #{tpu_custom_call.1} parent=43 // pred_region
        %p697 = scmp.lt.s32.totalorder %s27, 0
        %s698 = scalar_select %p697, %s27, 0
        %s699 = smul.addr %s698, 2
        %s700 = scalar_lea.vmem %s9, %s699
      $region92: #{tpu_custom_call.1} parent=43 // pred_fallthru
        _
      // Predicated region
      $region93: #{tpu_custom_call.1} parent=43 // pred_check
        %p701 = pneg %p315
      $region94: #{tpu_custom_call.1} parent=43 // pred_check_branch
        %703 = sbr.rel (%p701) target = $region96
      $region95: #{tpu_custom_call.1} parent=43 // pred_region
        %p704 = scmp.lt.s32.totalorder %s27, 0
        %s705 = scalar_select %p704, %s27, 0
        %s706 = smul.addr %s705, 2
        %s707 = scalar_lea.vmem %s10, %s706
      $region96: #{tpu_custom_call.1} parent=43 // pred_fallthru
        _
      // Predicated region
      $region97: #{tpu_custom_call.1} parent=43 // pred_check
        %p708 = pneg %p341
      $region98: #{tpu_custom_call.1} parent=43 // pred_check_branch
        %710 = sbr.rel (%p708) target = $region100
      $region99: #{tpu_custom_call.1} parent=43 // pred_region
        %p711 = scmp.lt.s32.totalorder %s27, 0
        %s712 = scalar_select %p711, %s27, 0
        %s713 = smul.addr %s712, 2
        %s714 = scalar_lea.vmem %s11, %s713
      $region100: #{tpu_custom_call.1} parent=43 // pred_fallthru
        _
    $region44: #{tpu_custom_call.1} parent=5 // pred_fallthru
      _
    %p715 = scmp.le.s32.totalorder 2, %s18
    // Predicated region
    $region101: #{tpu_custom_call.1} parent=5 // pred_check
      %p716 = pneg %p715
    $region102: #{tpu_custom_call.1} parent=5 // pred_check_branch
      %718 = sbr.rel (%p716) target = $region104
    $region103: #{tpu_custom_call.1} parent=5 // pred_region
      %s719 = ssub.s32 %s18, 2
    $region104: #{tpu_custom_call.1} parent=5 // pred_fallthru
      _
  $region6: #{tpu_custom_call.1} parent=0 // loop_footer
    %s22 = sadd.s32 1, %s18
  $region7: #{tpu_custom_call.1} parent=0 // loop_footer_branch
    %17 = sbr.rel target = $region3
  $region8: #{tpu_custom_call.1} parent=0 // loop_exit
    _

</llo_original>
